<compile_context>
chip_gen: v6e
topology: v6e:2x2x1
jax: 0.10.0
libtpu: 0.0.40
codegen_flags: <defaults>
</compile_context>

<pallas_src>
import jax
import jax.numpy as jnp
from jax.experimental import pallas as pl
from jax.experimental.pallas import tpu as pltpu


def _round_up(n, m):
    return ((n + m - 1) // m) * m


def _vmem_capacity_bytes():
    try:
        return int(pltpu.get_tpu_info().vmem_capacity_bytes)
    except Exception:
        return 64 << 20   # conservative: v7x per-TC VMEM; v5e/v6e actually have 128 MiB


def highway_kernel(x_ref, w_ref, b_ref, o_ref):
    """x_ref (tm, Fp) f32 ; w_ref (Fp, 2*tn) ; b_ref (1, 2*tn) f32 ; o_ref (tm, tn)."""
    tn = o_ref.shape[-1]
    fp = x_ref.shape[-1]
    x = x_ref[...]                                    # f32, kept for the residual path

    # One fused projection per column block: [gate | h] = x @ [Wg_j | Wh_j] + [bg_j | bh_j]
    z = jnp.dot(x.astype(w_ref.dtype), w_ref[...],
                preferred_element_type=jnp.float32) + b_ref[...]      # (tm, 2*tn) f32

    # sigmoid(z) == 0.5*(tanh(z/2) + 1): single EUP tanh, no exp + divide.
    gate = 0.5 * (jnp.tanh(0.5 * z[:, :tn]) + 1.0)    # T(x)
    h = jnp.maximum(z[:, tn:], 0.0)                   # H(x) = relu(linear)

    if tn == fp:
        x_j = x                                       # single column block
    else:
        j = pl.program_id(1)                          # residual slice for column block j
        x_j = x_ref[:, pl.ds(pl.multiple_of(j * tn, 128), tn)]

    # Padded lanes: zero weight/bias padding gives h == 0 and x_j == 0 there, so the
    # combine below yields exactly 0 (and those lanes are sliced off by the wrapper).
    # y = gate*h + (1-gate)*x  ==  x + gate*(h - x)   (3 VALU ops)
    o_ref[...] = (x_j + gate * (h - x_j)).astype(o_ref.dtype)


def prepare_highway_params(wg, bg, wh, bh, *, matmul_dtype=jnp.bfloat16,
                           max_weight_vmem_bytes=None):
    """Fold the two nn.Linear weights into one fused, column-block-interleaved
    (F_pad, 2*F_pad) matrix plus matching bias.

    This is XLA glue, NOT the hot path: call it once per weight update (or cache the
    result keyed on the weights) and reuse it across forward calls.
    """
    F = wg.shape[0]
    assert wg.shape == (F, F) and wh.shape == (F, F)
    F_pad = _round_up(F, 128)                          # lane-dense feature axis
    w_isz = jnp.dtype(matmul_dtype).itemsize

    if max_weight_vmem_bytes is None:
        # Budget ~1/3 of VMEM for the weight block(s): 128 MiB parts (v5e/v6e) keep the
        # fused weight fully resident up to F ~ 3k; 64 MiB v7x tiles columns earlier.
        max_weight_vmem_bytes = max(8 << 20, _vmem_capacity_bytes() // 3)

    lanes = F_pad // 128
    n_col = lanes                                      # worst case: tn = 128
    for n in range(1, lanes + 1):
        if lanes % n:
            continue
        tn_c = F_pad // n
        bufs = 1 if n == 1 else 2                      # resident weight is single-buffered
        if F_pad * 2 * tn_c * w_isz * bufs <= max_weight_vmem_bytes:
            n_col = n
            break
    tn = F_pad // n_col

    f32 = jnp.float32
    wg_t = jnp.zeros((F_pad, F_pad), matmul_dtype).at[:F, :F].set(wg.T.astype(matmul_dtype))
    wh_t = jnp.zeros((F_pad, F_pad), matmul_dtype).at[:F, :F].set(wh.T.astype(matmul_dtype))
    # Column-block interleave: block j holds [Wg[:, j*tn:(j+1)*tn] | Wh[:, j*tn:(j+1)*tn]]
    # so gate and h columns stay paired inside one (Fp, 2*tn) weight tile.
    w = jnp.concatenate([wg_t.reshape(F_pad, n_col, tn),
                         wh_t.reshape(F_pad, n_col, tn)], axis=2).reshape(F_pad, 2 * F_pad)
    bg_p = jnp.zeros((F_pad,), f32).at[:F].set(bg.astype(f32))
    bh_p = jnp.zeros((F_pad,), f32).at[:F].set(bh.astype(f32))
    b = jnp.concatenate([bg_p.reshape(n_col, tn),
                         bh_p.reshape(n_col, tn)], axis=1).reshape(1, 2 * F_pad)

    return dict(w=w, b=b, F=F, F_pad=F_pad, tn=tn, n_col=n_col, matmul_dtype=matmul_dtype)


def _choose_tm(B, F_pad):
    # Target ~1 MiB f32 x tile (measured 85%+ of HBM roofline), MXU-friendly multiple of
    # 256, clamped to [256, 2048] rows.
    tm = max(256, min(2048, (1 << 20) // (F_pad * 4)))
    tm = _round_up(tm, 256)
    B8 = _round_up(B, 8)
    if B8 <= tm:
        # Small batch: keep >= 2 batch grid steps so the "parallel" axis can shard
        # across v7x's two TensorCores (no effect on single-TC v5e/v6e).
        tm = _round_up(-(-B8 // 2), 8) if B8 >= 16 else B8
    return tm


def highway_layer(x, params, *, tm=None):
    """Fused Highway forward:  y = sigmoid(x@Wg^T+bg) * relu(x@Wh^T+bh) + (1-gate)*x.

    x      : (B, F) float32
    params : output of prepare_highway_params (fused weight/bias + tiling metadata)
    """
    B, F = x.shape
    assert F == params["F"]
    F_pad, tn, n_col = params["F_pad"], params["tn"], params["n_col"]
    w, b = params["w"], params["b"]
    w_isz = jnp.dtype(params["matmul_dtype"]).itemsize
    x_isz = x.dtype.itemsize

    if tm is None:
        tm = _choose_tm(B, F_pad)
    tm = _round_up(min(tm, _round_up(B, 8)), 8)        # never over-pad the batch
    B_pad = _round_up(B, tm)
    n_row = B_pad // tm

    x_p = x
    if (B_pad, F_pad) != (B, F):
        x_p = jnp.zeros((B_pad, F_pad), x.dtype).at[:B, :F].set(x)

    # --- VMEM accounting drives vmem_limit_bytes (default scoped limit is only 16/32 MiB) ---
    w_bufs = 1 if n_col == 1 else 2
    footprint = (tm * F_pad * x_isz * 2                # x tile, double buffered
                 + tm * tn * x_isz * 2                 # out tile, double buffered
                 + F_pad * 2 * tn * w_isz * w_bufs     # fused weight block(s)
                 + 2 * tn * 4 * 2                      # fused bias
                 + tm * 2 * tn * 4 * 4)                # z + gate/h/combine f32 temps
    cap = _vmem_capacity_bytes()
    vmem_limit = int(min(max(footprint + (8 << 20), 32 << 20),
                         max(cap - (4 << 20), 32 << 20)))

    cost = pl.CostEstimate(
        flops=int(4 * B_pad * F_pad * F_pad),                       # (B,Fp) x (Fp,2Fp)
        transcendentals=int(B_pad * F_pad),                         # tanh (sigmoid)
        bytes_accessed=int(B_pad * F_pad * x_isz * 2                # x in + y out
                           + w.size * w_isz * (n_row if n_col > 1 else 1)
                           + b.size * 4),
    )

    def build(single_buffer_params):
        # Grid-invariant weight/bias (constant index_map) only need ONE pipeline buffer.
        pm = dict(pipeline_mode=pl.Buffered(1)) if single_buffer_params else {}
        grid_spec = pltpu.PrefetchScalarGridSpec(
            num_scalar_prefetch=0,
            grid=(n_row, n_col),                               # (batch tiles, feature-column tiles)
            in_specs=[
                pl.BlockSpec((tm, F_pad), lambda i, j: (i, 0)),       # x row tile, resident across j
                pl.BlockSpec((F_pad, 2 * tn), lambda i, j: (0, j), **pm),   # fused [Wg_j | Wh_j]
                pl.BlockSpec((1, 2 * tn), lambda i, j: (0, j), **pm),       # fused [bg_j | bh_j]
            ],
            out_specs=pl.BlockSpec((tm, tn), lambda i, j: (i, j)),
        )
        return pl.pallas_call(
            highway_kernel,
            out_shape=jax.ShapeDtypeStruct((B_pad, F_pad), x.dtype),
            grid_spec=grid_spec,
            compiler_params=pltpu.CompilerParams(
                dimension_semantics=("parallel", "arbitrary"),   # batch shards across TCs on v7x
                vmem_limit_bytes=vmem_limit),
            cost_estimate=cost,
        )

    try:
        out = build(single_buffer_params=(n_col == 1))(x_p, w, b)
    except Exception:
        # TODO(synk): pl.Buffered(1) rejected by this jax version; fall back to default
        # double buffering (costs one extra weight-sized VMEM buffer).
        out = build(single_buffer_params=False)(x_p, w, b)

    if (B_pad, F_pad) != (B, F):
        out = out[:B, :F]
    return out


def highway_ref(x, wg, bg, wh, bh):
    gate = jax.nn.sigmoid(x @ wg.T + bg)
    h = jnp.maximum(x @ wh.T + bh, 0.0)
    return gate * h + (1.0 - gate) * x


if __name__ == "__main__":
    key = jax.random.PRNGKey(0)

    def make_case(k, B, F):
        kx, kwg, kbg, kwh, kbh = jax.random.split(k, 5)
        bound = 1.0 / (F ** 0.5)
        x = jax.random.normal(kx, (B, F), dtype=jnp.float32)
        wg = jax.random.uniform(kwg, (F, F), minval=-bound, maxval=bound, dtype=jnp.float32)
        bg = jax.random.uniform(kbg, (F,), minval=-bound, maxval=bound, dtype=jnp.float32)
        wh = jax.random.uniform(kwh, (F, F), minval=-bound, maxval=bound, dtype=jnp.float32)
        bh = jax.random.uniform(kbh, (F,), minval=-bound, maxval=bound, dtype=jnp.float32)
        return x, wg, bg, wh, bh

    k1, k2, k3 = jax.random.split(key, 3)

    # Case 1: module-sized input (B=16, F=64) -> exercises row/lane padding.
    x1, wg1, bg1, wh1, bh1 = make_case(k1, 16, 64)
    ref1 = highway_ref(x1, wg1, bg1, wh1, bh1)

    p1_f32 = prepare_highway_params(wg1, bg1, wh1, bh1, matmul_dtype=jnp.float32)
    out1_f32 = jax.block_until_ready(highway_layer(x1, p1_f32))
    assert out1_f32.shape == (16, 64)
    assert jnp.allclose(out1_f32, ref1, atol=1e-4, rtol=1e-4), "f32 path mismatch"

    p1_bf16 = prepare_highway_params(wg1, bg1, wh1, bh1)       # bf16 MXU path (default)
    out1_bf16 = jax.block_until_ready(highway_layer(x1, p1_bf16))
    assert jnp.allclose(out1_bf16, ref1, atol=2e-2, rtol=2e-2), "bf16 path mismatch"

    # Case 2: lane-dense shape (B=128, F=128) -> two batch grid steps, no padding.
    x2, wg2, bg2, wh2, bh2 = make_case(k2, 128, 128)
    p2 = prepare_highway_params(wg2, bg2, wh2, bh2)
    out2 = jax.block_until_ready(highway_layer(x2, p2))
    ref2 = highway_ref(x2, wg2, bg2, wh2, bh2)
    assert out2.shape == (128, 128)
    assert jnp.allclose(out2, ref2, atol=2e-2, rtol=2e-2), "bf16 path mismatch (case 2)"

    # Case 3: force the feature-column-tiled path (the large-F / v7x regime) at a small
    # shape by shrinking the weight VMEM budget, f32 matmul for a tight check.
    x3, wg3, bg3, wh3, bh3 = make_case(k3, 32, 256)
    ref3 = highway_ref(x3, wg3, bg3, wh3, bh3)
    p3 = prepare_highway_params(wg3, bg3, wh3, bh3, matmul_dtype=jnp.float32,
                                max_weight_vmem_bytes=300 * 1024)
    assert p3["n_col"] > 1, "column tiling not engaged"
    out3 = jax.block_until_ready(highway_layer(x3, p3))
    assert out3.shape == (32, 256)
    assert jnp.allclose(out3, ref3, atol=1e-4, rtol=1e-4), "column-tiled path mismatch"

    print("KERNEL_OK")
</pallas_src>

<mosaic_0001>
module attributes {stable_mosaic.version = 11 : i64} {
  func.func @highway_kernel(%arg0: i32, %arg1: i32, %arg2: memref<8x128xf32, #tpu.memory_space<vmem>>, %arg3: memref<128x256xf32, #tpu.memory_space<vmem>>, %arg4: memref<1x256xf32, #tpu.memory_space<vmem>>, %arg5: memref<8x128xf32, #tpu.memory_space<vmem>>) attributes {dimension_semantics = [#tpu.dimension_semantics<parallel>, #tpu.dimension_semantics<arbitrary>], iteration_bounds = array<i64: 2, 1>, scalar_prefetch = 0 : i64, scratch_operands = 0 : i64, tpu.core_type = #tpu.core_type<tc>, window_params = [{transform_indices = @transform_0, window_bounds = array<i64: 8, 128>}, {pipeline_mode = #tpu.pipeline_mode<synchronous>, transform_indices = @transform_1, window_bounds = array<i64: 128, 256>}, {pipeline_mode = #tpu.pipeline_mode<synchronous>, transform_indices = @transform_2, window_bounds = array<i64: 1, 256>}, {transform_indices = @transform_3, window_bounds = array<i64: 8, 128>}]} {
    %c0 = arith.constant 0 : index
    %c0_0 = arith.constant 0 : index
    %0 = vector.load %arg2[%c0, %c0_0] : memref<8x128xf32, #tpu.memory_space<vmem>>, vector<8x128xf32>
    %c0_1 = arith.constant 0 : index
    %c0_2 = arith.constant 0 : index
    %1 = vector.load %arg3[%c0_1, %c0_2] : memref<128x256xf32, #tpu.memory_space<vmem>>, vector<128x256xf32>
    %cst = arith.constant dense<0.000000e+00> : vector<8x256xf32>
    %2 = tpu.matmul %0, %1, %cst {dimension_numbers = #tpu.dot_dimension_numbers<[1], [0], [0], [1], [0, 0, 1, 1], [], []>} : vector<8x128xf32>, vector<128x256xf32>, vector<8x256xf32> -> vector<8x256xf32>
    %c0_3 = arith.constant 0 : index
    %c0_4 = arith.constant 0 : index
    %3 = vector.load %arg4[%c0_3, %c0_4] : memref<1x256xf32, #tpu.memory_space<vmem>>, vector<1x256xf32>
    %4 = vector.broadcast %3 : vector<1x256xf32> to vector<8x256xf32>
    %5 = arith.addf %2, %4 : vector<8x256xf32>
    %6 = vector.extract_strided_slice %5 {offsets = [0, 0], sizes = [8, 128], strides = [1, 1]} : vector<8x256xf32> to vector<8x128xf32>
    %cst_5 = arith.constant 5.000000e-01 : f32
    %7 = vector.broadcast %cst_5 : f32 to vector<8x128xf32>
    %8 = arith.mulf %7, %6 : vector<8x128xf32>
    %9 = math.tanh %8 : vector<8x128xf32>
    %cst_6 = arith.constant 1.000000e+00 : f32
    %10 = vector.broadcast %cst_6 : f32 to vector<8x128xf32>
    %11 = arith.addf %9, %10 : vector<8x128xf32>
    %cst_7 = arith.constant 5.000000e-01 : f32
    %12 = vector.broadcast %cst_7 : f32 to vector<8x128xf32>
    %13 = arith.mulf %12, %11 : vector<8x128xf32>
    %14 = vector.extract_strided_slice %5 {offsets = [0, 128], sizes = [8, 128], strides = [1, 1]} : vector<8x256xf32> to vector<8x128xf32>
    %cst_8 = arith.constant 0.000000e+00 : f32
    %15 = vector.broadcast %cst_8 : f32 to vector<8x128xf32>
    %16 = arith.maximumf %14, %15 : vector<8x128xf32>
    %17 = arith.subf %16, %0 : vector<8x128xf32>
    %18 = arith.mulf %13, %17 : vector<8x128xf32>
    %19 = arith.addf %0, %18 : vector<8x128xf32>
    %c0_9 = arith.constant 0 : index
    %c0_10 = arith.constant 0 : index
    %20 = vector.load %arg5[%c0_9, %c0_10] : memref<8x128xf32, #tpu.memory_space<vmem>>, vector<8x128xf32>
    tpu.vector_store %arg5[%c0_9, %c0_10], %19 {strides = array<i32>} : memref<8x128xf32, #tpu.memory_space<vmem>>, vector<8x128xf32>,
    return
  }
  func.func @transform_0(%arg0: i32, %arg1: i32) -> (i32, i32) {
    %c0_i32 = arith.constant 0 : i32
    %c0_i32_0 = arith.constant 0 : i32
    return %arg0, %c0_i32 : i32, i32
  }
  func.func @transform_1(%arg0: i32, %arg1: i32) -> (i32, i32) {
    %c0_i32 = arith.constant 0 : i32
    %c0_i32_0 = arith.constant 0 : i32
    return %c0_i32, %arg1 : i32, i32
  }
  func.func @transform_2(%arg0: i32, %arg1: i32) -> (i32, i32) {
    %c0_i32 = arith.constant 0 : i32
    %c0_i32_0 = arith.constant 0 : i32
    return %c0_i32, %arg1 : i32, i32
  }
  func.func @transform_3(%arg0: i32, %arg1: i32) -> (i32, i32) {
    %c0_i32 = arith.constant 0 : i32
    return %arg0, %arg1 : i32, i32
  }
}

module attributes {stable_mosaic.version = 11 : i64} {
  func.func @highway_kernel(%arg0: i32, %arg1: i32, %arg2: memref<8x128xf32, #tpu.memory_space<vmem>>, %arg3: memref<128x256xf32, #tpu.memory_space<vmem>>, %arg4: memref<1x256xf32, #tpu.memory_space<vmem>>, %arg5: memref<8x128xf32, #tpu.memory_space<vmem>>) attributes {dimension_semantics = [#tpu.dimension_semantics<parallel>, #tpu.dimension_semantics<arbitrary>], iteration_bounds = array<i64: 2, 1>, scalar_prefetch = 0 : i64, scratch_operands = 0 : i64, tpu.core_type = #tpu.core_type<tc>, window_params = [{transform_indices = @transform_0, window_bounds = array<i64: 8, 128>}, {transform_indices = @transform_1, window_bounds = array<i64: 128, 256>}, {transform_indices = @transform_2, window_bounds = array<i64: 1, 256>}, {transform_indices = @transform_3, window_bounds = array<i64: 8, 128>}]} {
    %c0 = arith.constant 0 : index
    %c0_0 = arith.constant 0 : index
    %0 = vector.load %arg2[%c0, %c0_0] : memref<8x128xf32, #tpu.memory_space<vmem>>, vector<8x128xf32>
    %c0_1 = arith.constant 0 : index
    %c0_2 = arith.constant 0 : index
    %1 = vector.load %arg3[%c0_1, %c0_2] : memref<128x256xf32, #tpu.memory_space<vmem>>, vector<128x256xf32>
    %cst = arith.constant dense<0.000000e+00> : vector<8x256xf32>
    %2 = tpu.matmul %0, %1, %cst {dimension_numbers = #tpu.dot_dimension_numbers<[1], [0], [0], [1], [0, 0, 1, 1], [], []>} : vector<8x128xf32>, vector<128x256xf32>, vector<8x256xf32> -> vector<8x256xf32>
    %c0_3 = arith.constant 0 : index
    %c0_4 = arith.constant 0 : index
    %3 = vector.load %arg4[%c0_3, %c0_4] : memref<1x256xf32, #tpu.memory_space<vmem>>, vector<1x256xf32>
    %4 = vector.broadcast %3 : vector<1x256xf32> to vector<8x256xf32>
    %5 = arith.addf %2, %4 : vector<8x256xf32>
    %6 = vector.extract_strided_slice %5 {offsets = [0, 0], sizes = [8, 128], strides = [1, 1]} : vector<8x256xf32> to vector<8x128xf32>
    %cst_5 = arith.constant 5.000000e-01 : f32
    %7 = vector.broadcast %cst_5 : f32 to vector<8x128xf32>
    %8 = arith.mulf %7, %6 : vector<8x128xf32>
    %9 = math.tanh %8 : vector<8x128xf32>
    %cst_6 = arith.constant 1.000000e+00 : f32
    %10 = vector.broadcast %cst_6 : f32 to vector<8x128xf32>
    %11 = arith.addf %9, %10 : vector<8x128xf32>
    %cst_7 = arith.constant 5.000000e-01 : f32
    %12 = vector.broadcast %cst_7 : f32 to vector<8x128xf32>
    %13 = arith.mulf %12, %11 : vector<8x128xf32>
    %14 = vector.extract_strided_slice %5 {offsets = [0, 128], sizes = [8, 128], strides = [1, 1]} : vector<8x256xf32> to vector<8x128xf32>
    %cst_8 = arith.constant 0.000000e+00 : f32
    %15 = vector.broadcast %cst_8 : f32 to vector<8x128xf32>
    %16 = arith.maximumf %14, %15 : vector<8x128xf32>
    %17 = arith.subf %16, %0 : vector<8x128xf32>
    %18 = arith.mulf %13, %17 : vector<8x128xf32>
    %19 = arith.addf %0, %18 : vector<8x128xf32>
    %c0_9 = arith.constant 0 : index
    %c0_10 = arith.constant 0 : index
    %20 = vector.load %arg5[%c0_9, %c0_10] : memref<8x128xf32, #tpu.memory_space<vmem>>, vector<8x128xf32>
    tpu.vector_store %arg5[%c0_9, %c0_10], %19 {strides = array<i32>} : memref<8x128xf32, #tpu.memory_space<vmem>>, vector<8x128xf32>,
    return
  }
  func.func @transform_0(%arg0: i32, %arg1: i32) -> (i32, i32) {
    %c0_i32 = arith.constant 0 : i32
    %c0_i32_0 = arith.constant 0 : i32
    return %arg0, %c0_i32 : i32, i32
  }
  func.func @transform_1(%arg0: i32, %arg1: i32) -> (i32, i32) {
    %c0_i32 = arith.constant 0 : i32
    %c0_i32_0 = arith.constant 0 : i32
    return %c0_i32, %arg1 : i32, i32
  }
  func.func @transform_2(%arg0: i32, %arg1: i32) -> (i32, i32) {
    %c0_i32 = arith.constant 0 : i32
    %c0_i32_0 = arith.constant 0 : i32
    return %c0_i32, %arg1 : i32, i32
  }
  func.func @transform_3(%arg0: i32, %arg1: i32) -> (i32, i32) {
    %c0_i32 = arith.constant 0 : i32
    return %arg0, %arg1 : i32, i32
  }
}

</mosaic_0001>

<llo_original>
// kernel: tpu_custom_call.1
$region0: #{tpu_custom_call.1}
  #allocation0 [shape = 'u32[]', space=smem, size = 0x4, offset = 0x4, fixed_abs, tag = 'smem constant byte address 0x4 - core index']
  #allocation1 [shape = 'u32[144,128]{1,0:T(1,128)}', space=vmem, size = 0x12000, scoped, tag = 'internal scratch']
  %s0 = inlined_call_operand.hbm [shape: f32[16,128], index: 0, kind: input, shape index: {}]
  %s1 = inlined_call_operand.hbm [shape: f32[128,256], index: 1, kind: input, shape index: {}]
  %s2 = inlined_call_operand.vmem [shape: f32[1,256], index: 2, kind: input, shape index: {}]
  %s3 = inlined_call_operand.hbm [shape: f32[16,128], index: 3, kind: output, shape index: {}]
  %s4 = sld [smem:[#allocation0]]
  $region53: #{tpu_custom_call.1} parent=0
    _
  %s6 = ssub.s32 1, %s4
  %s7 = scalar_select 0, %s6, %s4
  $region1: #{tpu_custom_call.1} parent=0
    #allocation2 [shape = 'u8[8192]{0}', space=vmem, size = 0x2000, scoped, tag = 'input window, operand 0']
    #allocation3 [shape = 's32[2]{0}', space=sflag, size = 0x8, scoped, tag = 'scoped memory for tpu_custom_call.1']
    #allocation4 [shape = 's32[2]{0}', space=sflag, size = 0x8, scoped, tag = 'scoped memory for tpu_custom_call.1']
    #allocation5 [shape = 'u8[131072]{0}', space=vmem, size = 0x20000, scoped, tag = 'input window, operand 1, single buffered']
    #allocation6 [shape = 's32[1]{0}', space=sflag, size = 0x4, scoped, tag = 'scoped memory for tpu_custom_call.1']
    #allocation7 [shape = 'u8[8192]{0}', space=vmem, size = 0x2000, scoped, tag = 'output window, operand 0']
    %8 = vsyncpa [#allocation3], 0
    %s9 = scalar_lea.sflag [#allocation3], 1
    %10 = vsyncpa %s9, 0
    %11 = vsyncpa [#allocation6], 0
    %12 = vsyncpa [#allocation4], 0
    %s13 = scalar_lea.sflag [#allocation4], 1
    %14 = vsyncpa %s13, 0
    loop: start=0, step=1, limit=4
    $region2: #{tpu_custom_call.1} parent=1 // loop_pre_header
      _
    $region3: #{tpu_custom_call.1} parent=1 // loop_header
      %s16 = sphi 0, %s20
      %p17 = scmp.ge.s32.totalorder %s16, 4
      %s23 = sphi 0, %s35
      %s24 = sphi 0, %s31
      %s25 = sphi 0, %s23
      %s26 = sphi 0, %s24
      %s27 = sphi 0, %s25
      %s28 = sphi 0, %s26
      %s38 = sphi 0, %s40
      %s41 = sphi 0, %s38
      %s42 = sphi 0, %s41
      %s58 = sphi 0, %s42
      %s64 = sphi 0, %s66
      %s67 = sphi 0, %s64
      %s68 = sphi 0, %s67
      %s84 = sphi 0, %s68
      %s90 = sphi 0, %s92
      %s93 = sphi 0, %s90
      %s94 = sphi 0, %s93
      %s110 = sphi 0, %s94
      %s118 = sphi 0, %s120
      %s121 = sphi 0, %s118
      %s122 = sphi 0, %s121
      %s138 = sphi 0, %s122
    $region4: #{tpu_custom_call.1} parent=1 // loop_header_branch
      %19 = sbr.rel (%p17) target = $region8
    $region5: #{tpu_custom_call.1} parent=1 // loop_body
      %s21 = ssub.s32 %s16, 1
      %s22 = ssub.s32 %s16, 2
      %s29 = sadd.s32 1, %s24
      %p30 = scmp.ge.s32.totalorder %s29, 1
      %s31 = scalar_select %p30, 0, %s29
      %s32 = sadd.s32 1, %s23
      %s33 = scalar_select %p30, %s32, %s23
      %p34 = scmp.ge.s32.totalorder %s33, 2
      %s35 = scalar_select %p34, 0, %s33
      %s36 = ssub.s32 %s23, %s35
      %p37 = scmp.eq.s32.totalorder %s36, 0
      %s39 = sadd.s32 %s38, 1
      %s40 = scalar_select %p37, %s38, %s39
      %p43 = pneg %p37
      %p44 = scmp.eq.s32.totalorder %s16, 1
      %p45 = por %p43, %p44
      %p46 = scmp.ne.s32.totalorder %s38, %s41
      %p47 = scmp.eq.s32.totalorder %s16, 0
      %p48 = por %p46, %p47
      %p49 = scmp.ne.s32.totalorder %s38, %s41
      %p50 = scmp.eq.s32.totalorder %s21, 1
      %p51 = por %p49, %p50
      %p52 = scmp.ne.s32.totalorder %s41, %s42
      %p53 = scmp.eq.s32.totalorder %s21, 0
      %p54 = por %p52, %p53
      %p55 = scmp.ne.s32.totalorder %s41, %s42
      %p56 = scmp.eq.s32.totalorder %s22, 1
      %p57 = por %p55, %p56
      %p59 = scmp.ne.s32.totalorder %s42, %s58
      %p60 = scmp.eq.s32.totalorder %s22, 0
      %p61 = por %p59, %p60
      %s62 = ssub.s32 %s24, %s31
      %p63 = scmp.eq.s32.totalorder %s62, 0
      %s65 = sadd.s32 %s64, 1
      %s66 = scalar_select %p63, %s64, %s65
      %p69 = pneg %p63
      %p70 = scmp.eq.s32.totalorder %s16, 1
      %p71 = por %p69, %p70
      %p72 = scmp.ne.s32.totalorder %s64, %s67
      %p73 = scmp.eq.s32.totalorder %s16, 0
      %p74 = por %p72, %p73
      %p75 = scmp.ne.s32.totalorder %s64, %s67
      %p76 = scmp.eq.s32.totalorder %s21, 1
      %p77 = por %p75, %p76
      %p78 = scmp.ne.s32.totalorder %s67, %s68
      %p79 = scmp.eq.s32.totalorder %s21, 0
      %p80 = por %p78, %p79
      %p81 = scmp.ne.s32.totalorder %s67, %s68
      %p82 = scmp.eq.s32.totalorder %s22, 1
      %p83 = por %p81, %p82
      %p85 = scmp.ne.s32.totalorder %s68, %s84
      %p86 = scmp.eq.s32.totalorder %s22, 0
      %p87 = por %p85, %p86
      %s88 = ssub.s32 %s24, %s31
      %p89 = scmp.eq.s32.totalorder %s88, 0
      %s91 = sadd.s32 %s90, 1
      %s92 = scalar_select %p89, %s90, %s91
      %p95 = pneg %p89
      %p96 = scmp.eq.s32.totalorder %s16, 1
      %p97 = por %p95, %p96
      %p98 = scmp.ne.s32.totalorder %s90, %s93
      %p99 = scmp.eq.s32.totalorder %s16, 0
      %p100 = por %p98, %p99
      %p101 = scmp.ne.s32.totalorder %s90, %s93
      %p102 = scmp.eq.s32.totalorder %s21, 1
      %p103 = por %p101, %p102
      %p104 = scmp.ne.s32.totalorder %s93, %s94
      %p105 = scmp.eq.s32.totalorder %s21, 0
      %p106 = por %p104, %p105
      %p107 = scmp.ne.s32.totalorder %s93, %s94
      %p108 = scmp.eq.s32.totalorder %s22, 1
      %p109 = por %p107, %p108
      %p111 = scmp.ne.s32.totalorder %s94, %s110
      %p112 = scmp.eq.s32.totalorder %s22, 0
      %p113 = por %p111, %p112
      %s114 = ssub.s32 %s23, %s35
      %s115 = ssub.s32 %s24, %s31
      %s116 = sor.u32 %s114, %s115
      %p117 = scmp.eq.s32.totalorder %s116, 0
      %s119 = sadd.s32 %s118, 1
      %s120 = scalar_select %p117, %s118, %s119
      %p123 = pneg %p117
      %p124 = scmp.eq.s32.totalorder %s16, 1
      %p125 = por %p123, %p124
      %p126 = scmp.ne.s32.totalorder %s118, %s121
      %p127 = scmp.eq.s32.totalorder %s16, 0
      %p128 = por %p126, %p127
      %p129 = scmp.ne.s32.totalorder %s118, %s121
      %p130 = scmp.eq.s32.totalorder %s21, 1
      %p131 = por %p129, %p130
      %p132 = scmp.ne.s32.totalorder %s121, %s122
      %p133 = scmp.eq.s32.totalorder %s21, 0
      %p134 = por %p132, %p133
      %p135 = scmp.ne.s32.totalorder %s121, %s122
      %p136 = scmp.eq.s32.totalorder %s22, 1
      %p137 = por %p135, %p136
      %p139 = scmp.ne.s32.totalorder %s122, %s138
      %p140 = scmp.eq.s32.totalorder %s22, 0
      %p141 = por %p139, %p140
      %p142 = scmp.le.s32.totalorder 1, %s16
      %p143 = scmp.lt.s32.totalorder %s16, 3
      %p144 = pnand %p142, %p143
      %p145 = pneg %p144
      // Predicated region
      $region9: #{tpu_custom_call.1} parent=5 // pred_check
        _
      $region10: #{tpu_custom_call.1} parent=5 // pred_check_branch
        %147 = sbr.rel (%p144) target = $region12
      $region11: #{tpu_custom_call.1} parent=5 // pred_region
        %s148 = ssub.s32 %s16, 1
        // Predicated region
        $region13: #{tpu_custom_call.1} parent=11 // pred_check
          %p149 = pneg %p80
        $region14: #{tpu_custom_call.1} parent=11 // pred_check_branch
          %151 = sbr.rel (%p149) target = $region16
        $region15: #{tpu_custom_call.1} parent=11 // pred_region
          %s152 = smul.u32 2, %s26
          %s154 = ssub.s32 4096, 4096
          %155 = vsyncadd [#allocation6], %s154
          %s156 = smul.addr %s152, 128
          %s157 = scalar_lea.hbm %s1, %s156
          %s158 = sshll.u32 [#allocation5], 4
          %s159 = int_to_ptr.vmem [resolvable:$true] %s158
          %164 = dma.hbm_to_vmem [thread:$0]  %s157, 4096, %s159, [#allocation6], 256, 256, 16
        $region16: #{tpu_custom_call.1} parent=11 // pred_fallthru
          _
        // Predicated region
        $region17: #{tpu_custom_call.1} parent=11 // pred_check
          %p165 = pneg %p106
        $region18: #{tpu_custom_call.1} parent=11 // pred_check_branch
          %167 = sbr.rel (%p165) target = $region20
        $region19: #{tpu_custom_call.1} parent=11 // pred_region
          %s168 = smul.u32 2, %s26
          %p169 = scmp.lt.s32.totalorder %s168, 1
          %s170 = scalar_select %p169, %s168, 1
          %s171 = scalar_lea.vmem %s2, %s170
          %s172 = smul.u32 2, %s26
        $region20: #{tpu_custom_call.1} parent=11 // pred_fallthru
          _
      $region12: #{tpu_custom_call.1} parent=5 // pred_fallthru
        _
      %p173 = scmp.lt.s32.totalorder %s16, 2
      // Predicated region
      $region21: #{tpu_custom_call.1} parent=5 // pred_check
        %p174 = pneg %p173
      $region22: #{tpu_custom_call.1} parent=5 // pred_check_branch
        %176 = sbr.rel (%p174) target = $region24
      $region23: #{tpu_custom_call.1} parent=5 // pred_region
        // Predicated region
        $region25: #{tpu_custom_call.1} parent=23 // pred_check
          %p177 = pneg %p48
        $region26: #{tpu_custom_call.1} parent=23 // pred_check_branch
          %179 = sbr.rel (%p177) target = $region28
        $region27: #{tpu_custom_call.1} parent=23 // pred_region
          %s180 = sand.u32 %s38, 1
          %s181 = scalar_lea.sflag [#allocation3], %s180
          %s182 = sand.u32 %s38, 1
          %s183 = smul.addr %s182, 8
          %s184 = scalar_lea.vmem [#allocation2], %s183
          %s186 = ssub.s32 128, 128
          %187 = vsyncadd %s181, %s186
          %s188 = smul.addr %s23, 128
          %s189 = scalar_lea.hbm %s0, %s188
          %s191 = sshll.u32 %s184, 4
          %s192 = int_to_ptr.vmem [resolvable:$true] %s191
          %194 = dma.hbm_to_vmem [thread:$0]  %s189, 128, %s192, %s181
        $region28: #{tpu_custom_call.1} parent=23 // pred_fallthru
          _
      $region24: #{tpu_custom_call.1} parent=5 // pred_fallthru
        _
      %p195 = scmp.le.s32.totalorder 1, %s16
      %p196 = scmp.lt.s32.totalorder %s16, 3
      %p197 = pnand %p195, %p196
      %p198 = pneg %p197
      // Predicated region
      $region29: #{tpu_custom_call.1} parent=5 // pred_check
        _
      $region30: #{tpu_custom_call.1} parent=5 // pred_check_branch
        %200 = sbr.rel (%p197) target = $region32
      $region31: #{tpu_custom_call.1} parent=5 // pred_region
        %s201 = ssub.s32 %s16, 1
        %s202 = sand.u32 %s41, 1
        %s203 = scalar_lea.sflag [#allocation3], %s202
        %s204 = sand.u32 %s41, 1
        %s205 = smul.addr %s204, 8
        %s206 = scalar_lea.vmem [#allocation2], %s205
        // Predicated region
        $region33: #{tpu_custom_call.1} parent=31 // pred_check
          %p207 = pneg %p54
        $region34: #{tpu_custom_call.1} parent=31 // pred_check_branch
          %209 = sbr.rel (%p207) target = $region36
        $region35: #{tpu_custom_call.1} parent=31 // pred_region
          %210 = dma.done %s203, 128
        $region36: #{tpu_custom_call.1} parent=31 // pred_fallthru
          _
        // Predicated region
        $region37: #{tpu_custom_call.1} parent=31 // pred_check
          %p211 = pneg %p80
        $region38: #{tpu_custom_call.1} parent=31 // pred_check_branch
          %213 = sbr.rel (%p211) target = $region40
        $region39: #{tpu_custom_call.1} parent=31 // pred_region
          %214 = dma.done [#allocation6], 4096
        $region40: #{tpu_custom_call.1} parent=31 // pred_fallthru
          _
        %s215 = sand.u32 %s41, 1
        %s216 = scalar_lea.sflag [#allocation3], %s215
        %s217 = sand.u32 %s41, 1
        %s218 = smul.addr %s217, 8
        %s219 = scalar_lea.vmem [#allocation2], %s218
        %p220 = pneg %p54
        %p221 = pneg %p51
        %p222 = pneg %p80
        %p223 = pneg %p77
        %s224 = smul.u32 2, %s26
        %p225 = scmp.lt.s32.totalorder %s224, 1
        %s226 = scalar_select %p225, %s224, 1
        %s227 = scalar_lea.vmem %s2, %s226
        %p228 = pneg %p106
        %p229 = pneg %p103
        %p230 = pneg %p134
        %p231 = pneg %p131
        %s232 = sand.u32 %s121, 1
        %s233 = scalar_lea.sflag [#allocation4], %s232
        %s234 = sand.u32 %s121, 1
        %s235 = smul.addr %s234, 8
        %s236 = scalar_lea.vmem [#allocation7], %s235
        %s237 = smul.u32 2, %s26
        %s238 = smul.u32 2, %s26
        %p239 = scmp.lt.s32.totalorder %s238, 1
        %s240 = scalar_select %p239, %s238, 1
        %s241 = scalar_lea.vmem %s2, %s240
        %s242 = smul.u32 2, %s26
        %v243 = vld [vmem:[%s206] sm:$0xff]
        %v244 = vld [vmem:[#allocation5] sm:$0xff]
        %v245 = vld [vmem:[#allocation5 + $0x8] sm:$0xff]
        %v246 = vld [vmem:[#allocation5 + $0x10] sm:$0xff]
        %v247 = vld [vmem:[#allocation5 + $0x18] sm:$0xff]
        %v248 = vld [vmem:[#allocation5 + $0x20] sm:$0xff]
        %v249 = vld [vmem:[#allocation5 + $0x28] sm:$0xff]
        %v250 = vld [vmem:[#allocation5 + $0x30] sm:$0xff]
        %v251 = vld [vmem:[#allocation5 + $0x38] sm:$0xff]
        %v252 = vld [vmem:[#allocation5 + $0x40] sm:$0xff]
        %v253 = vld [vmem:[#allocation5 + $0x48] sm:$0xff]
        %v254 = vld [vmem:[#allocation5 + $0x50] sm:$0xff]
        %v255 = vld [vmem:[#allocation5 + $0x58] sm:$0xff]
        %v256 = vld [vmem:[#allocation5 + $0x60] sm:$0xff]
        %v257 = vld [vmem:[#allocation5 + $0x68] sm:$0xff]
        %v258 = vld [vmem:[#allocation5 + $0x70] sm:$0xff]
        %v259 = vld [vmem:[#allocation5 + $0x78] sm:$0xff]
        %v260 = vld [vmem:[#allocation5 + $0x80] sm:$0xff]
        %v261 = vld [vmem:[#allocation5 + $0x88] sm:$0xff]
        %v262 = vld [vmem:[#allocation5 + $0x90] sm:$0xff]
        %v263 = vld [vmem:[#allocation5 + $0x98] sm:$0xff]
        %v264 = vld [vmem:[#allocation5 + $0xa0] sm:$0xff]
        %v265 = vld [vmem:[#allocation5 + $0xa8] sm:$0xff]
        %v266 = vld [vmem:[#allocation5 + $0xb0] sm:$0xff]
        %v267 = vld [vmem:[#allocation5 + $0xb8] sm:$0xff]
        %v268 = vld [vmem:[#allocation5 + $0xc0] sm:$0xff]
        %v269 = vld [vmem:[#allocation5 + $0xc8] sm:$0xff]
        %v270 = vld [vmem:[#allocation5 + $0xd0] sm:$0xff]
        %v271 = vld [vmem:[#allocation5 + $0xd8] sm:$0xff]
        %v272 = vld [vmem:[#allocation5 + $0xe0] sm:$0xff]
        %v273 = vld [vmem:[#allocation5 + $0xe8] sm:$0xff]
        %v274 = vld [vmem:[#allocation5 + $0xf0] sm:$0xff]
        %v275 = vld [vmem:[#allocation5 + $0xf8] sm:$0xff]
        %v276 = vld [vmem:[%s241] sm:$0x3]
        %v278 = vlaneseq
        %v279 = vshrl.u32 %v278, 7
        %v280 = vsub.s32 0, %v279
        %v281 = vrot.slane %v276, %v280
        %v282 = vlaneseq
        %v283 = vshrl.u32 %v282, 7
        %v284 = vsub.s32 1, %v283
        %v285 = vrot.slane %v276, %v284
        %288 = vmatprep.subr.mxu0 %v275
        %289 = vmatpush1.msra.mxu0 %v274
        %290 = vmatprep.subr.mxu0 %v273
        %291 = vmatpush1.msra.mxu0 %v272
        %292 = vmatprep.subr.mxu0 %v271
        %293 = vmatpush1.msra.mxu0 %v270
        %294 = vmatprep.subr.mxu0 %v269
        %295 = vmatpush1.msra.mxu0 %v268
        %296 = vmatprep.subr.mxu0 %v267
        %297 = vmatpush1.msra.mxu0 %v266
        %298 = vmatprep.subr.mxu0 %v265
        %299 = vmatpush1.msra.mxu0 %v264
        %300 = vmatprep.subr.mxu0 %v263
        %301 = vmatpush1.msra.mxu0 %v262
        %302 = vmatprep.subr.mxu0 %v261
        %303 = vmatpush1.msra.mxu0 %v260
        %304 = vmatprep.subr.mxu0 %v259
        %305 = vmatpush1.msra.mxu0 %v258
        %306 = vmatprep.subr.mxu0 %v257
        %307 = vmatpush1.msra.mxu0 %v256
        %308 = vmatprep.subr.mxu0 %v255
        %309 = vmatpush1.msra.mxu0 %v254
        %310 = vmatprep.subr.mxu0 %v253
        %311 = vmatpush1.msra.mxu0 %v252
        %312 = vmatprep.subr.mxu0 %v251
        %313 = vmatpush1.msra.mxu0 %v250
        %314 = vmatprep.subr.mxu0 %v249
        %315 = vmatpush1.msra.mxu0 %v248
        %316 = vmatprep.subr.mxu0 %v247
        %317 = vmatpush1.msra.mxu0 %v246
        %318 = vmatprep.subr.mxu0 %v245
        %319 = vmatpush1.msra.mxu0 %v244
        %320 = vmatprep.subr.mxu0 0.0
        %321 = vmatpush2.msra.mxu0 0.0
        %322 = vmatprep.subr.mxu0 0.0
        %323 = vmatpush2.msra.mxu0 0.0
        %324 = vmatprep.subr.mxu0 0.0
        %325 = vmatpush2.msra.mxu0 0.0
        %326 = vmatprep.subr.mxu0 0.0
        %327 = vmatpush2.msra.mxu0 0.0
        %328 = vmatprep.subr.mxu0 0.0
        %329 = vmatpush2.msra.mxu0 0.0
        %330 = vmatprep.subr.mxu0 0.0
        %331 = vmatpush2.msra.mxu0 0.0
        %332 = vmatprep.subr.mxu0 0.0
        %333 = vmatpush2.msra.mxu0 0.0
        %334 = vmatprep.subr.mxu0 0.0
        %335 = vmatpush2.msra.mxu0 0.0
        %336 = vmatprep.subr.mxu0 0.0
        %337 = vmatpush2.msra.mxu0 0.0
        %338 = vmatprep.subr.mxu0 0.0
        %339 = vmatpush2.msra.mxu0 0.0
        %340 = vmatprep.subr.mxu0 0.0
        %341 = vmatpush2.msra.mxu0 0.0
        %342 = vmatprep.subr.mxu0 0.0
        %343 = vmatpush2.msra.mxu0 0.0
        %344 = vmatprep.subr.mxu0 0.0
        %345 = vmatpush2.msra.mxu0 0.0
        %346 = vmatprep.subr.mxu0 0.0
        %347 = vmatpush2.msra.mxu0 0.0
        %348 = vmatprep.subr.mxu0 0.0
        %349 = vmatpush2.msra.mxu0 0.0
        %350 = vmatprep.subr.mxu0 0.0
        %351 = vmatpush2.msra.mxu0 0.0
        %352 = vmatprep.mubr.f32.mxu0 0.0
        %353 = vmatmul.mubr.f32.gmra.mxu0 %v243
        %v354 = vpop.f32.mrf.mxu0
        %v355 = vadd.f32 %v281, %v354
        %v356 = vpop.f32.mrf.mxu0
        %v357 = vadd.f32 %v285, %v356
        %358 = vdwg.mxu0
        %v359 = vmul.f32 %v355, 0.5
        %v360 = vtanh.pop %v359
        %v361 = vadd.f32 %v360, 1.0
        %v362 = vmul.f32 %v361, 0.5
        %v363 = vmax.f32 %v357, 0.0
        %v364 = vsub.f32 %v363, %v243
        %v365 = vmul.f32 %v362, %v364
        %v366 = vadd.f32 %v243, %v365
        %367 = vst [vmem:[%s236] sm:$0xff] %v366
        %s368 = sand.u32 %s121, 1
        %s369 = scalar_lea.sflag [#allocation4], %s368
        %s370 = sand.u32 %s121, 1
        %s371 = smul.addr %s370, 8
        %s372 = scalar_lea.vmem [#allocation7], %s371
        // Predicated region
        $region41: #{tpu_custom_call.1} parent=31 // pred_check
          %p373 = pneg %p131
        $region42: #{tpu_custom_call.1} parent=31 // pred_check_branch
          %375 = sbr.rel (%p373) target = $region44
        $region43: #{tpu_custom_call.1} parent=31 // pred_region
          %s377 = ssub.s32 128, 128
          %378 = vsyncadd %s369, %s377
          %s379 = sadd.s32 %s26, %s25
          %s380 = smul.addr %s379, 128
          %s381 = scalar_lea.hbm %s3, %s380
          %s383 = sshll.u32 %s372, 4
          %s384 = int_to_ptr.vmem [resolvable:$true] %s383
          %386 = dma.vmem_to_hbm [thread:$0]  %s384, 128, %s381, %s369
        $region44: #{tpu_custom_call.1} parent=31 // pred_fallthru
          _
      $region32: #{tpu_custom_call.1} parent=5 // pred_fallthru
        _
      %p387 = scmp.le.s32.totalorder 2, %s16
      // Predicated region
      $region45: #{tpu_custom_call.1} parent=5 // pred_check
        %p388 = pneg %p387
      $region46: #{tpu_custom_call.1} parent=5 // pred_check_branch
        %390 = sbr.rel (%p388) target = $region48
      $region47: #{tpu_custom_call.1} parent=5 // pred_region
        %s391 = ssub.s32 %s16, 2
        // Predicated region
        $region49: #{tpu_custom_call.1} parent=47 // pred_check
          %p392 = pneg %p137
        $region50: #{tpu_custom_call.1} parent=47 // pred_check_branch
          %394 = sbr.rel (%p392) target = $region52
        $region51: #{tpu_custom_call.1} parent=47 // pred_region
          %s395 = sand.u32 %s122, 1
          %s396 = scalar_lea.sflag [#allocation4], %s395
          %s397 = sand.u32 %s122, 1
          %s398 = smul.addr %s397, 8
          %s399 = scalar_lea.vmem [#allocation7], %s398
          %400 = dma.done %s396, 128
        $region52: #{tpu_custom_call.1} parent=47 // pred_fallthru
          _
      $region48: #{tpu_custom_call.1} parent=5 // pred_fallthru
        _
    $region6: #{tpu_custom_call.1} parent=1 // loop_footer
      %s20 = sadd.s32 1, %s16
    $region7: #{tpu_custom_call.1} parent=1 // loop_footer_branch
      %15 = sbr.rel target = $region3
    $region8: #{tpu_custom_call.1} parent=1 // loop_exit
      _
    %401 = vsyncpa [#allocation3], 1
    %s402 = scalar_lea.sflag [#allocation3], 1
    %403 = vsyncpa %s402, 1
    %404 = vsyncpa [#allocation6], 1
    %405 = vsyncpa [#allocation4], 1
    %s406 = scalar_lea.sflag [#allocation4], 1
    %407 = vsyncpa %s406, 1

// kernel: tpu_custom_call.1
$region0: #{tpu_custom_call.1}
  #allocation0 [shape = 'u32[]', space=smem, size = 0x4, offset = 0x4, fixed_abs, tag = 'smem constant byte address 0x4 - core index']
  #allocation1 [shape = 'u32[144,128]{1,0:T(1,128)}', space=vmem, size = 0x12000, scoped, tag = 'internal scratch']
  %s0 = inlined_call_operand.hbm [shape: f32[16,128], index: 0, kind: input, shape index: {}]
  %s1 = inlined_call_operand.hbm [shape: f32[128,256], index: 1, kind: input, shape index: {}]
  %s2 = inlined_call_operand.vmem [shape: f32[1,256], index: 2, kind: input, shape index: {}]
  %s3 = inlined_call_operand.hbm [shape: f32[16,128], index: 3, kind: output, shape index: {}]
  %s4 = sld [smem:[#allocation0]]
  $region53: #{tpu_custom_call.1} parent=0
    _
  %s6 = ssub.s32 1, %s4
  %s7 = scalar_select 0, %s6, %s4
  $region1: #{tpu_custom_call.1} parent=0
    #allocation2 [shape = 'u8[8192]{0}', space=vmem, size = 0x2000, scoped, tag = 'input window, operand 0']
    #allocation3 [shape = 's32[2]{0}', space=sflag, size = 0x8, scoped, tag = 'scoped memory for tpu_custom_call.1']
    #allocation4 [shape = 's32[2]{0}', space=sflag, size = 0x8, scoped, tag = 'scoped memory for tpu_custom_call.1']
    #allocation5 [shape = 'u8[131072]{0}', space=vmem, size = 0x20000, scoped, tag = 'input window, operand 1, single buffered']
    #allocation6 [shape = 's32[1]{0}', space=sflag, size = 0x4, scoped, tag = 'scoped memory for tpu_custom_call.1']
    #allocation7 [shape = 'u8[8192]{0}', space=vmem, size = 0x2000, scoped, tag = 'output window, operand 0']
    %8 = vsyncpa [#allocation3], 0
    %s9 = scalar_lea.sflag [#allocation3], 1
    %10 = vsyncpa %s9, 0
    %11 = vsyncpa [#allocation6], 0
    %12 = vsyncpa [#allocation4], 0
    %s13 = scalar_lea.sflag [#allocation4], 1
    %14 = vsyncpa %s13, 0
    loop: start=0, step=1, limit=4
    $region2: #{tpu_custom_call.1} parent=1 // loop_pre_header
      _
    $region3: #{tpu_custom_call.1} parent=1 // loop_header
      %s16 = sphi 0, %s20
      %p17 = scmp.ge.s32.totalorder %s16, 4
      %s23 = sphi 0, %s35
      %s24 = sphi 0, %s31
      %s25 = sphi 0, %s23
      %s26 = sphi 0, %s24
      %s27 = sphi 0, %s25
      %s28 = sphi 0, %s26
      %s38 = sphi 0, %s40
      %s41 = sphi 0, %s38
      %s42 = sphi 0, %s41
      %s58 = sphi 0, %s42
      %s64 = sphi 0, %s66
      %s67 = sphi 0, %s64
      %s68 = sphi 0, %s67
      %s84 = sphi 0, %s68
      %s90 = sphi 0, %s92
      %s93 = sphi 0, %s90
      %s94 = sphi 0, %s93
      %s110 = sphi 0, %s94
      %s118 = sphi 0, %s120
      %s121 = sphi 0, %s118
      %s122 = sphi 0, %s121
      %s138 = sphi 0, %s122
    $region4: #{tpu_custom_call.1} parent=1 // loop_header_branch
      %19 = sbr.rel (%p17) target = $region8
    $region5: #{tpu_custom_call.1} parent=1 // loop_body
      %s21 = ssub.s32 %s16, 1
      %s22 = ssub.s32 %s16, 2
      %s29 = sadd.s32 1, %s24
      %p30 = scmp.ge.s32.totalorder %s29, 1
      %s31 = scalar_select %p30, 0, %s29
      %s32 = sadd.s32 1, %s23
      %s33 = scalar_select %p30, %s32, %s23
      %p34 = scmp.ge.s32.totalorder %s33, 2
      %s35 = scalar_select %p34, 0, %s33
      %s36 = ssub.s32 %s23, %s35
      %p37 = scmp.eq.s32.totalorder %s36, 0
      %s39 = sadd.s32 %s38, 1
      %s40 = scalar_select %p37, %s38, %s39
      %p43 = pneg %p37
      %p44 = scmp.eq.s32.totalorder %s16, 1
      %p45 = por %p43, %p44
      %p46 = scmp.ne.s32.totalorder %s38, %s41
      %p47 = scmp.eq.s32.totalorder %s16, 0
      %p48 = por %p46, %p47
      %p49 = scmp.ne.s32.totalorder %s38, %s41
      %p50 = scmp.eq.s32.totalorder %s21, 1
      %p51 = por %p49, %p50
      %p52 = scmp.ne.s32.totalorder %s41, %s42
      %p53 = scmp.eq.s32.totalorder %s21, 0
      %p54 = por %p52, %p53
      %p55 = scmp.ne.s32.totalorder %s41, %s42
      %p56 = scmp.eq.s32.totalorder %s22, 1
      %p57 = por %p55, %p56
      %p59 = scmp.ne.s32.totalorder %s42, %s58
      %p60 = scmp.eq.s32.totalorder %s22, 0
      %p61 = por %p59, %p60
      %s62 = ssub.s32 %s24, %s31
      %p63 = scmp.eq.s32.totalorder %s62, 0
      %s65 = sadd.s32 %s64, 1
      %s66 = scalar_select %p63, %s64, %s65
      %p69 = pneg %p63
      %p70 = scmp.eq.s32.totalorder %s16, 1
      %p71 = por %p69, %p70
      %p72 = scmp.ne.s32.totalorder %s64, %s67
      %p73 = scmp.eq.s32.totalorder %s16, 0
      %p74 = por %p72, %p73
      %p75 = scmp.ne.s32.totalorder %s64, %s67
      %p76 = scmp.eq.s32.totalorder %s21, 1
      %p77 = por %p75, %p76
      %p78 = scmp.ne.s32.totalorder %s67, %s68
      %p79 = scmp.eq.s32.totalorder %s21, 0
      %p80 = por %p78, %p79
      %p81 = scmp.ne.s32.totalorder %s67, %s68
      %p82 = scmp.eq.s32.totalorder %s22, 1
      %p83 = por %p81, %p82
      %p85 = scmp.ne.s32.totalorder %s68, %s84
      %p86 = scmp.eq.s32.totalorder %s22, 0
      %p87 = por %p85, %p86
      %s88 = ssub.s32 %s24, %s31
      %p89 = scmp.eq.s32.totalorder %s88, 0
      %s91 = sadd.s32 %s90, 1
      %s92 = scalar_select %p89, %s90, %s91
      %p95 = pneg %p89
      %p96 = scmp.eq.s32.totalorder %s16, 1
      %p97 = por %p95, %p96
      %p98 = scmp.ne.s32.totalorder %s90, %s93
      %p99 = scmp.eq.s32.totalorder %s16, 0
      %p100 = por %p98, %p99
      %p101 = scmp.ne.s32.totalorder %s90, %s93
      %p102 = scmp.eq.s32.totalorder %s21, 1
      %p103 = por %p101, %p102
      %p104 = scmp.ne.s32.totalorder %s93, %s94
      %p105 = scmp.eq.s32.totalorder %s21, 0
      %p106 = por %p104, %p105
      %p107 = scmp.ne.s32.totalorder %s93, %s94
      %p108 = scmp.eq.s32.totalorder %s22, 1
      %p109 = por %p107, %p108
      %p111 = scmp.ne.s32.totalorder %s94, %s110
      %p112 = scmp.eq.s32.totalorder %s22, 0
      %p113 = por %p111, %p112
      %s114 = ssub.s32 %s23, %s35
      %s115 = ssub.s32 %s24, %s31
      %s116 = sor.u32 %s114, %s115
      %p117 = scmp.eq.s32.totalorder %s116, 0
      %s119 = sadd.s32 %s118, 1
      %s120 = scalar_select %p117, %s118, %s119
      %p123 = pneg %p117
      %p124 = scmp.eq.s32.totalorder %s16, 1
      %p125 = por %p123, %p124
      %p126 = scmp.ne.s32.totalorder %s118, %s121
      %p127 = scmp.eq.s32.totalorder %s16, 0
      %p128 = por %p126, %p127
      %p129 = scmp.ne.s32.totalorder %s118, %s121
      %p130 = scmp.eq.s32.totalorder %s21, 1
      %p131 = por %p129, %p130
      %p132 = scmp.ne.s32.totalorder %s121, %s122
      %p133 = scmp.eq.s32.totalorder %s21, 0
      %p134 = por %p132, %p133
      %p135 = scmp.ne.s32.totalorder %s121, %s122
      %p136 = scmp.eq.s32.totalorder %s22, 1
      %p137 = por %p135, %p136
      %p139 = scmp.ne.s32.totalorder %s122, %s138
      %p140 = scmp.eq.s32.totalorder %s22, 0
      %p141 = por %p139, %p140
      %p142 = scmp.le.s32.totalorder 1, %s16
      %p143 = scmp.lt.s32.totalorder %s16, 3
      %p144 = pnand %p142, %p143
      %p145 = pneg %p144
      // Predicated region
      $region9: #{tpu_custom_call.1} parent=5 // pred_check
        _
      $region10: #{tpu_custom_call.1} parent=5 // pred_check_branch
        %147 = sbr.rel (%p144) target = $region12
      $region11: #{tpu_custom_call.1} parent=5 // pred_region
        %s148 = ssub.s32 %s16, 1
        // Predicated region
        $region13: #{tpu_custom_call.1} parent=11 // pred_check
          %p149 = pneg %p80
        $region14: #{tpu_custom_call.1} parent=11 // pred_check_branch
          %151 = sbr.rel (%p149) target = $region16
        $region15: #{tpu_custom_call.1} parent=11 // pred_region
          %s152 = smul.u32 2, %s26
          %s154 = ssub.s32 4096, 4096
          %155 = vsyncadd [#allocation6], %s154
          %s156 = smul.addr %s152, 128
          %s157 = scalar_lea.hbm %s1, %s156
          %s158 = sshll.u32 [#allocation5], 4
          %s159 = int_to_ptr.vmem [resolvable:$true] %s158
          %164 = dma.hbm_to_vmem [thread:$0]  %s157, 4096, %s159, [#allocation6], 256, 256, 16
        $region16: #{tpu_custom_call.1} parent=11 // pred_fallthru
          _
        // Predicated region
        $region17: #{tpu_custom_call.1} parent=11 // pred_check
          %p165 = pneg %p106
        $region18: #{tpu_custom_call.1} parent=11 // pred_check_branch
          %167 = sbr.rel (%p165) target = $region20
        $region19: #{tpu_custom_call.1} parent=11 // pred_region
          %s168 = smul.u32 2, %s26
          %p169 = scmp.lt.s32.totalorder %s168, 1
          %s170 = scalar_select %p169, %s168, 1
          %s171 = scalar_lea.vmem %s2, %s170
          %s172 = smul.u32 2, %s26
        $region20: #{tpu_custom_call.1} parent=11 // pred_fallthru
          _
      $region12: #{tpu_custom_call.1} parent=5 // pred_fallthru
        _
      %p173 = scmp.lt.s32.totalorder %s16, 2
      // Predicated region
      $region21: #{tpu_custom_call.1} parent=5 // pred_check
        %p174 = pneg %p173
      $region22: #{tpu_custom_call.1} parent=5 // pred_check_branch
        %176 = sbr.rel (%p174) target = $region24
      $region23: #{tpu_custom_call.1} parent=5 // pred_region
        // Predicated region
        $region25: #{tpu_custom_call.1} parent=23 // pred_check
          %p177 = pneg %p48
        $region26: #{tpu_custom_call.1} parent=23 // pred_check_branch
          %179 = sbr.rel (%p177) target = $region28
        $region27: #{tpu_custom_call.1} parent=23 // pred_region
          %s180 = sand.u32 %s38, 1
          %s181 = scalar_lea.sflag [#allocation3], %s180
          %s182 = sand.u32 %s38, 1
          %s183 = smul.addr %s182, 8
          %s184 = scalar_lea.vmem [#allocation2], %s183
          %s186 = ssub.s32 128, 128
          %187 = vsyncadd %s181, %s186
          %s188 = smul.addr %s23, 128
          %s189 = scalar_lea.hbm %s0, %s188
          %s191 = sshll.u32 %s184, 4
          %s192 = int_to_ptr.vmem [resolvable:$true] %s191
          %194 = dma.hbm_to_vmem [thread:$0]  %s189, 128, %s192, %s181
        $region28: #{tpu_custom_call.1} parent=23 // pred_fallthru
          _
      $region24: #{tpu_custom_call.1} parent=5 // pred_fallthru
        _
      %p195 = scmp.le.s32.totalorder 1, %s16
      %p196 = scmp.lt.s32.totalorder %s16, 3
      %p197 = pnand %p195, %p196
      %p198 = pneg %p197
      // Predicated region
      $region29: #{tpu_custom_call.1} parent=5 // pred_check
        _
      $region30: #{tpu_custom_call.1} parent=5 // pred_check_branch
        %200 = sbr.rel (%p197) target = $region32
      $region31: #{tpu_custom_call.1} parent=5 // pred_region
        %s201 = ssub.s32 %s16, 1
        %s202 = sand.u32 %s41, 1
        %s203 = scalar_lea.sflag [#allocation3], %s202
        %s204 = sand.u32 %s41, 1
        %s205 = smul.addr %s204, 8
        %s206 = scalar_lea.vmem [#allocation2], %s205
        // Predicated region
        $region33: #{tpu_custom_call.1} parent=31 // pred_check
          %p207 = pneg %p54
        $region34: #{tpu_custom_call.1} parent=31 // pred_check_branch
          %209 = sbr.rel (%p207) target = $region36
        $region35: #{tpu_custom_call.1} parent=31 // pred_region
          %210 = dma.done %s203, 128
        $region36: #{tpu_custom_call.1} parent=31 // pred_fallthru
          _
        // Predicated region
        $region37: #{tpu_custom_call.1} parent=31 // pred_check
          %p211 = pneg %p80
        $region38: #{tpu_custom_call.1} parent=31 // pred_check_branch
          %213 = sbr.rel (%p211) target = $region40
        $region39: #{tpu_custom_call.1} parent=31 // pred_region
          %214 = dma.done [#allocation6], 4096
        $region40: #{tpu_custom_call.1} parent=31 // pred_fallthru
          _
        %s215 = sand.u32 %s41, 1
        %s216 = scalar_lea.sflag [#allocation3], %s215
        %s217 = sand.u32 %s41, 1
        %s218 = smul.addr %s217, 8
        %s219 = scalar_lea.vmem [#allocation2], %s218
        %p220 = pneg %p54
        %p221 = pneg %p51
        %p222 = pneg %p80
        %p223 = pneg %p77
        %s224 = smul.u32 2, %s26
        %p225 = scmp.lt.s32.totalorder %s224, 1
        %s226 = scalar_select %p225, %s224, 1
        %s227 = scalar_lea.vmem %s2, %s226
        %p228 = pneg %p106
        %p229 = pneg %p103
        %p230 = pneg %p134
        %p231 = pneg %p131
        %s232 = sand.u32 %s121, 1
        %s233 = scalar_lea.sflag [#allocation4], %s232
        %s234 = sand.u32 %s121, 1
        %s235 = smul.addr %s234, 8
        %s236 = scalar_lea.vmem [#allocation7], %s235
        %s237 = smul.u32 2, %s26
        %s238 = smul.u32 2, %s26
        %p239 = scmp.lt.s32.totalorder %s238, 1
        %s240 = scalar_select %p239, %s238, 1
        %s241 = scalar_lea.vmem %s2, %s240
        %s242 = smul.u32 2, %s26
        %v243 = vld [vmem:[%s206] sm:$0xff]
        %v244 = vld [vmem:[#allocation5] sm:$0xff]
        %v245 = vld [vmem:[#allocation5 + $0x8] sm:$0xff]
        %v246 = vld [vmem:[#allocation5 + $0x10] sm:$0xff]
        %v247 = vld [vmem:[#allocation5 + $0x18] sm:$0xff]
        %v248 = vld [vmem:[#allocation5 + $0x20] sm:$0xff]
        %v249 = vld [vmem:[#allocation5 + $0x28] sm:$0xff]
        %v250 = vld [vmem:[#allocation5 + $0x30] sm:$0xff]
        %v251 = vld [vmem:[#allocation5 + $0x38] sm:$0xff]
        %v252 = vld [vmem:[#allocation5 + $0x40] sm:$0xff]
        %v253 = vld [vmem:[#allocation5 + $0x48] sm:$0xff]
        %v254 = vld [vmem:[#allocation5 + $0x50] sm:$0xff]
        %v255 = vld [vmem:[#allocation5 + $0x58] sm:$0xff]
        %v256 = vld [vmem:[#allocation5 + $0x60] sm:$0xff]
        %v257 = vld [vmem:[#allocation5 + $0x68] sm:$0xff]
        %v258 = vld [vmem:[#allocation5 + $0x70] sm:$0xff]
        %v259 = vld [vmem:[#allocation5 + $0x78] sm:$0xff]
        %v260 = vld [vmem:[#allocation5 + $0x80] sm:$0xff]
        %v261 = vld [vmem:[#allocation5 + $0x88] sm:$0xff]
        %v262 = vld [vmem:[#allocation5 + $0x90] sm:$0xff]
        %v263 = vld [vmem:[#allocation5 + $0x98] sm:$0xff]
        %v264 = vld [vmem:[#allocation5 + $0xa0] sm:$0xff]
        %v265 = vld [vmem:[#allocation5 + $0xa8] sm:$0xff]
        %v266 = vld [vmem:[#allocation5 + $0xb0] sm:$0xff]
        %v267 = vld [vmem:[#allocation5 + $0xb8] sm:$0xff]
        %v268 = vld [vmem:[#allocation5 + $0xc0] sm:$0xff]
        %v269 = vld [vmem:[#allocation5 + $0xc8] sm:$0xff]
        %v270 = vld [vmem:[#allocation5 + $0xd0] sm:$0xff]
        %v271 = vld [vmem:[#allocation5 + $0xd8] sm:$0xff]
        %v272 = vld [vmem:[#allocation5 + $0xe0] sm:$0xff]
        %v273 = vld [vmem:[#allocation5 + $0xe8] sm:$0xff]
        %v274 = vld [vmem:[#allocation5 + $0xf0] sm:$0xff]
        %v275 = vld [vmem:[#allocation5 + $0xf8] sm:$0xff]
        %v276 = vld [vmem:[%s241] sm:$0x3]
        %v278 = vlaneseq
        %v279 = vshrl.u32 %v278, 7
        %v280 = vsub.s32 0, %v279
        %v281 = vrot.slane %v276, %v280
        %v282 = vlaneseq
        %v283 = vshrl.u32 %v282, 7
        %v284 = vsub.s32 1, %v283
        %v285 = vrot.slane %v276, %v284
        %288 = vmatprep.subr.mxu0 %v275
        %289 = vmatpush1.msra.mxu0 %v274
        %290 = vmatprep.subr.mxu0 %v273
        %291 = vmatpush1.msra.mxu0 %v272
        %292 = vmatprep.subr.mxu0 %v271
        %293 = vmatpush1.msra.mxu0 %v270
        %294 = vmatprep.subr.mxu0 %v269
        %295 = vmatpush1.msra.mxu0 %v268
        %296 = vmatprep.subr.mxu0 %v267
        %297 = vmatpush1.msra.mxu0 %v266
        %298 = vmatprep.subr.mxu0 %v265
        %299 = vmatpush1.msra.mxu0 %v264
        %300 = vmatprep.subr.mxu0 %v263
        %301 = vmatpush1.msra.mxu0 %v262
        %302 = vmatprep.subr.mxu0 %v261
        %303 = vmatpush1.msra.mxu0 %v260
        %304 = vmatprep.subr.mxu0 %v259
        %305 = vmatpush1.msra.mxu0 %v258
        %306 = vmatprep.subr.mxu0 %v257
        %307 = vmatpush1.msra.mxu0 %v256
        %308 = vmatprep.subr.mxu0 %v255
        %309 = vmatpush1.msra.mxu0 %v254
        %310 = vmatprep.subr.mxu0 %v253
        %311 = vmatpush1.msra.mxu0 %v252
        %312 = vmatprep.subr.mxu0 %v251
        %313 = vmatpush1.msra.mxu0 %v250
        %314 = vmatprep.subr.mxu0 %v249
        %315 = vmatpush1.msra.mxu0 %v248
        %316 = vmatprep.subr.mxu0 %v247
        %317 = vmatpush1.msra.mxu0 %v246
        %318 = vmatprep.subr.mxu0 %v245
        %319 = vmatpush1.msra.mxu0 %v244
        %320 = vmatprep.subr.mxu0 0.0
        %321 = vmatpush2.msra.mxu0 0.0
        %322 = vmatprep.subr.mxu0 0.0
        %323 = vmatpush2.msra.mxu0 0.0
        %324 = vmatprep.subr.mxu0 0.0
        %325 = vmatpush2.msra.mxu0 0.0
        %326 = vmatprep.subr.mxu0 0.0
        %327 = vmatpush2.msra.mxu0 0.0
        %328 = vmatprep.subr.mxu0 0.0
        %329 = vmatpush2.msra.mxu0 0.0
        %330 = vmatprep.subr.mxu0 0.0
        %331 = vmatpush2.msra.mxu0 0.0
        %332 = vmatprep.subr.mxu0 0.0
        %333 = vmatpush2.msra.mxu0 0.0
        %334 = vmatprep.subr.mxu0 0.0
        %335 = vmatpush2.msra.mxu0 0.0
        %336 = vmatprep.subr.mxu0 0.0
        %337 = vmatpush2.msra.mxu0 0.0
        %338 = vmatprep.subr.mxu0 0.0
        %339 = vmatpush2.msra.mxu0 0.0
        %340 = vmatprep.subr.mxu0 0.0
        %341 = vmatpush2.msra.mxu0 0.0
        %342 = vmatprep.subr.mxu0 0.0
        %343 = vmatpush2.msra.mxu0 0.0
        %344 = vmatprep.subr.mxu0 0.0
        %345 = vmatpush2.msra.mxu0 0.0
        %346 = vmatprep.subr.mxu0 0.0
        %347 = vmatpush2.msra.mxu0 0.0
        %348 = vmatprep.subr.mxu0 0.0
        %349 = vmatpush2.msra.mxu0 0.0
        %350 = vmatprep.subr.mxu0 0.0
        %351 = vmatpush2.msra.mxu0 0.0
        %352 = vmatprep.mubr.f32.mxu0 0.0
        %353 = vmatmul.mubr.f32.gmra.mxu0 %v243
        %v354 = vpop.f32.mrf.mxu0
        %v355 = vadd.f32 %v281, %v354
        %v356 = vpop.f32.mrf.mxu0
        %v357 = vadd.f32 %v285, %v356
        %358 = vdwg.mxu0
        %v359 = vmul.f32 %v355, 0.5
        %v360 = vtanh.pop %v359
        %v361 = vadd.f32 %v360, 1.0
        %v362 = vmul.f32 %v361, 0.5
        %v363 = vmax.f32 %v357, 0.0
        %v364 = vsub.f32 %v363, %v243
        %v365 = vmul.f32 %v362, %v364
        %v366 = vadd.f32 %v243, %v365
        %367 = vst [vmem:[%s236] sm:$0xff] %v366
        %s368 = sand.u32 %s121, 1
        %s369 = scalar_lea.sflag [#allocation4], %s368
        %s370 = sand.u32 %s121, 1
        %s371 = smul.addr %s370, 8
        %s372 = scalar_lea.vmem [#allocation7], %s371
        // Predicated region
        $region41: #{tpu_custom_call.1} parent=31 // pred_check
          %p373 = pneg %p131
        $region42: #{tpu_custom_call.1} parent=31 // pred_check_branch
          %375 = sbr.rel (%p373) target = $region44
        $region43: #{tpu_custom_call.1} parent=31 // pred_region
          %s377 = ssub.s32 128, 128
          %378 = vsyncadd %s369, %s377
          %s379 = sadd.s32 %s26, %s25
          %s380 = smul.addr %s379, 128
          %s381 = scalar_lea.hbm %s3, %s380
          %s383 = sshll.u32 %s372, 4
          %s384 = int_to_ptr.vmem [resolvable:$true] %s383
          %386 = dma.vmem_to_hbm [thread:$0]  %s384, 128, %s381, %s369
        $region44: #{tpu_custom_call.1} parent=31 // pred_fallthru
          _
      $region32: #{tpu_custom_call.1} parent=5 // pred_fallthru
        _
      %p387 = scmp.le.s32.totalorder 2, %s16
      // Predicated region
      $region45: #{tpu_custom_call.1} parent=5 // pred_check
        %p388 = pneg %p387
      $region46: #{tpu_custom_call.1} parent=5 // pred_check_branch
        %390 = sbr.rel (%p388) target = $region48
      $region47: #{tpu_custom_call.1} parent=5 // pred_region
        %s391 = ssub.s32 %s16, 2
        // Predicated region
        $region49: #{tpu_custom_call.1} parent=47 // pred_check
          %p392 = pneg %p137
        $region50: #{tpu_custom_call.1} parent=47 // pred_check_branch
          %394 = sbr.rel (%p392) target = $region52
        $region51: #{tpu_custom_call.1} parent=47 // pred_region
          %s395 = sand.u32 %s122, 1
          %s396 = scalar_lea.sflag [#allocation4], %s395
          %s397 = sand.u32 %s122, 1
          %s398 = smul.addr %s397, 8
          %s399 = scalar_lea.vmem [#allocation7], %s398
          %400 = dma.done %s396, 128
        $region52: #{tpu_custom_call.1} parent=47 // pred_fallthru
          _
      $region48: #{tpu_custom_call.1} parent=5 // pred_fallthru
        _
    $region6: #{tpu_custom_call.1} parent=1 // loop_footer
      %s20 = sadd.s32 1, %s16
    $region7: #{tpu_custom_call.1} parent=1 // loop_footer_branch
      %15 = sbr.rel target = $region3
    $region8: #{tpu_custom_call.1} parent=1 // loop_exit
      _
    %401 = vsyncpa [#allocation3], 1
    %s402 = scalar_lea.sflag [#allocation3], 1
    %403 = vsyncpa %s402, 1
    %404 = vsyncpa [#allocation6], 1
    %405 = vsyncpa [#allocation4], 1
    %s406 = scalar_lea.sflag [#allocation4], 1
    %407 = vsyncpa %s406, 1

</llo_original>
